<compile_context>
chip_gen: v7x
topology: tpu7x:2x2x1
jax: 0.10.0
libtpu: 0.0.40
codegen_flags: <defaults>
</compile_context>

<pallas_src>
import jax
import jax.numpy as jnp
from jax.experimental import pallas as pl
from jax.experimental.pallas import tpu as pltpu

LANE = 128  # TPU lane width; token tiles are whole lane groups.


def simple_nn_kernel(idx_ref, wft_ref, b1_ref, w2t_ref, b2_ref, out_ref):
    """One lane-tile of tokens, whole network fused, feature-major layout.

    Tokens live on the lane axis, so the output block is (out_s, TN):
    out_s full sublanes x TN (multiple of 128) lanes -> unmasked dense stores
    and exactly out_s*4 bytes/token of HBM writeback.

    idx_ref : (1, TN)  int32  token ids for this tile
    wft_ref : (H, V)   f32    (emb @ w1).T  -- hidden_1 folded into embedding
    b1_ref  : (H, 1)   f32
    w2t_ref : (O, H)   f32
    b2_ref  : (O, 1)   f32
    out_ref : (O, TN)  f32
    """
    idx = idx_ref[...]                                        # (1, TN)
    vocab = wft_ref.shape[1]
    tn = idx.shape[1]

    # Embedding (+ folded hidden_1) lookup as a transposed one-hot matmul.
    # Exact selection: one-hot entries are 0/1 and the table stays f32.
    # TODO(synk): for realistic vocab sizes replace the O(V*TN) one-hot build
    #   and K=V matmul with a scalar-prefetch / DMA row gather of the table.
    v_iota = jax.lax.broadcasted_iota(jnp.int32, (vocab, tn), 0)
    onehot_t = (v_iota == idx).astype(jnp.float32)            # (V, TN)

    # hT[k, t] = W_fused[idx[t], k]; bias + tanh in f32.
    h_t = jnp.dot(wft_ref[...], onehot_t,
                  preferred_element_type=jnp.float32)         # (H, TN)
    h_t = jnp.tanh(h_t + b1_ref[...])

    # Output layer + sigmoid; (O, TN) is lane-dense with zero padding bytes.
    o_t = jnp.dot(w2t_ref[...], h_t,
                  preferred_element_type=jnp.float32) + b2_ref[...]
    out_ref[...] = jax.nn.sigmoid(o_t)                        # (O, TN)


def fold_simple_nn_params(emb, w1, b1, w2, b2):
    """One-time parameter preprocessing (hoisted out of the per-call path).

    hidden_1 is folded into the embedding (W_fused = emb @ w1) and all weights
    are stored transposed / column-shaped in f32 for the feature-major kernel.
    """
    H = w1.shape[1]
    O = w2.shape[1]
    w_fused_t = (emb.astype(jnp.float32) @ w1.astype(jnp.float32)).T    # (H, V)
    b1_col = b1.reshape(H, 1).astype(jnp.float32)                       # (H, 1)
    w2_t = jnp.asarray(w2, jnp.float32).T                               # (O, H)
    b2_col = b2.reshape(O, 1).astype(jnp.float32)                       # (O, 1)
    return w_fused_t, b1_col, w2_t, b2_col


def simple_nn_forward(x_idx, folded_params, *, max_tile_n=1024):
    """x_idx: (B, S) integer tokens. Returns (B, S, out_s) float32."""
    w_fused_t, b1_col, w2_t, b2_col = folded_params
    H, V = w_fused_t.shape
    O = w2_t.shape[0]
    B, S = x_idx.shape
    N = B * S

    # Token tiling: tiles are whole 128-lane groups.  Bigger tiles amortize the
    # ~0.35us per-grid-step cost; when possible cap so the "parallel" axis has
    # >= 2 steps (v7x megacore).  max_tile_n=1024 keeps the (V,TN)+(H,TN) f32
    # intermediates around the 64-vreg budget.
    n_units = pl.cdiv(N, LANE)
    units_per_tile = min(max(1, max_tile_n // LANE), n_units)
    if n_units >= 2:
        units_per_tile = min(units_per_tile, pl.cdiv(n_units, 2))
    tn = units_per_tile * LANE
    num_tiles = pl.cdiv(n_units, units_per_tile)
    n_pad = num_tiles * tn

    # Flatten + pad token ids (pad lanes use id 0; their columns are dropped).
    # TODO(synk): PyTorch nn.Embedding raises on out-of-range ids; this clamp
    #   silently maps them into [0, V-1].
    idx_flat = jnp.clip(x_idx.reshape(-1).astype(jnp.int32), 0, V - 1)
    idx_pad = jnp.zeros((1, n_pad), jnp.int32).at[0, :N].set(idx_flat)

    cost = pl.CostEstimate(
        flops=2 * n_pad * (V * H + H * O),
        transcendentals=n_pad * (H + O),
        bytes_accessed=4 * (n_pad + O * n_pad + H * V + H + O * H + O),
    )

    # TODO(synk): for large V (DMA-gather path), add pipeline_mode=pl.Buffered(1)
    #   on the constant-index weight specs and an explicit vmem_limit_bytes
    #   (v7x has only 64 MiB physical VMEM); irrelevant at these weight sizes.
    out_t = pl.pallas_call(
        simple_nn_kernel,
        out_shape=jax.ShapeDtypeStruct((O, n_pad), jnp.float32),
        grid=(num_tiles,),
        in_specs=[
            pl.BlockSpec((1, tn), lambda i: (0, i)),      # token ids (tiled)
            pl.BlockSpec((H, V), lambda i: (0, 0)),       # fused table^T
            pl.BlockSpec((H, 1), lambda i: (0, 0)),       # b1
            pl.BlockSpec((O, H), lambda i: (0, 0)),       # w2^T
            pl.BlockSpec((O, 1), lambda i: (0, 0)),       # b2
        ],
        out_specs=pl.BlockSpec((O, tn), lambda i: (0, i)),
        compiler_params=pltpu.CompilerParams(
            dimension_semantics=("parallel",)),
        cost_estimate=cost,
    )(idx_pad, w_fused_t, b1_col, w2_t, b2_col)

    # Drop pad columns (touches only useful bytes + < tn pad tokens) and return
    # token-major (B, S, O).
    return out_t[:, :N].T.reshape(B, S, O)


def simple_nn_reference(x_idx, emb, w1, b1, w2, b2):
    x = emb[x_idx]                                            # (B, S, E)
    h = jnp.tanh(x @ w1 + b1)                                 # (B, S, H)
    return jax.nn.sigmoid(h @ w2 + b2)                        # (B, S, O)


if __name__ == "__main__":
    # Module hyperparameters (small, consistent with the forward pass).
    input_s = 32     # vocab size
    emb_dim = 16
    hidden_s = 32
    out_s = 8
    B, S = 2, 8

    key = jax.random.PRNGKey(0)
    k_idx, k_emb, k_w1, k_b1, k_w2, k_b2 = jax.random.split(key, 6)

    # Deterministic parameter init (mimicking the PyTorch init distributions).
    emb = jax.random.normal(k_emb, (input_s, emb_dim), jnp.float32)       # N(0,1)
    lim1 = 1.0 / jnp.sqrt(emb_dim)
    w1 = jax.random.uniform(k_w1, (emb_dim, hidden_s), jnp.float32, -lim1, lim1)
    b1 = jax.random.uniform(k_b1, (hidden_s,), jnp.float32, -lim1, lim1)
    lim2 = 1.0 / jnp.sqrt(hidden_s)
    w2 = jax.random.uniform(k_w2, (hidden_s, out_s), jnp.float32, -lim2, lim2)
    b2 = jax.random.uniform(k_b2, (out_s,), jnp.float32, -lim2, lim2)

    x_idx = jax.random.randint(k_idx, (B, S), 0, input_s, jnp.int32)

    params = fold_simple_nn_params(emb, w1, b1, w2, b2)   # one-time fold/transpose
    out = simple_nn_forward(x_idx, params)
    out = jax.block_until_ready(out)

    ref = simple_nn_reference(x_idx, emb, w1, b1, w2, b2)
    assert out.shape == (B, S, out_s)
    # All-f32 weights (no bf16 table pre-cast): residual error is only MXU
    # matmul rounding, so the tolerance is tightened vs. the previous 1e-2.
    assert jnp.allclose(out, ref, atol=2e-3, rtol=2e-3), (
        float(jnp.max(jnp.abs(out - ref))))

    print("KERNEL_OK")
</pallas_src>

<mosaic_0001>
module attributes {stable_mosaic.version = 11 : i64} {
  func.func @simple_nn_kernel(%arg0: i32, %arg1: memref<1x128xi32, #tpu.memory_space<vmem>>, %arg2: memref<32x32xf32, #tpu.memory_space<vmem>>, %arg3: memref<32x1xf32, #tpu.memory_space<vmem>>, %arg4: memref<8x32xf32, #tpu.memory_space<vmem>>, %arg5: memref<8x1xf32, #tpu.memory_space<vmem>>, %arg6: memref<8x128xf32, #tpu.memory_space<vmem>>) attributes {dimension_semantics = [#tpu.dimension_semantics<parallel>], iteration_bounds = array<i64: 1>, scalar_prefetch = 0 : i64, scratch_operands = 0 : i64, tpu.core_type = #tpu.core_type<tc>, window_params = [{transform_indices = @transform_0, window_bounds = array<i64: 1, 128>}, {pipeline_mode = #tpu.pipeline_mode<synchronous>, transform_indices = @transform_1, window_bounds = array<i64: 32, 32>}, {pipeline_mode = #tpu.pipeline_mode<synchronous>, transform_indices = @transform_2, window_bounds = array<i64: 32, 1>}, {pipeline_mode = #tpu.pipeline_mode<synchronous>, transform_indices = @transform_3, window_bounds = array<i64: 8, 32>}, {pipeline_mode = #tpu.pipeline_mode<synchronous>, transform_indices = @transform_4, window_bounds = array<i64: 8, 1>}, {transform_indices = @transform_5, window_bounds = array<i64: 8, 128>}]} {
    %c0 = arith.constant 0 : index
    %c0_0 = arith.constant 0 : index
    %0 = vector.load %arg1[%c0, %c0_0] : memref<1x128xi32, #tpu.memory_space<vmem>>, vector<1x128xi32>
    %1 = tpu.iota {dimensions = array<i32: 0>} : vector<32x128xi32>
    %2 = vector.broadcast %0 : vector<1x128xi32> to vector<32x128xi32>
    %3 = arith.cmpi eq, %1, %2 : vector<32x128xi32>
    %4 = arith.extui %3 : vector<32x128xi1> to vector<32x128xi32>
    %5 = arith.sitofp %4 : vector<32x128xi32> to vector<32x128xf32>
    %c0_1 = arith.constant 0 : index
    %c0_2 = arith.constant 0 : index
    %6 = vector.load %arg2[%c0_1, %c0_2] : memref<32x32xf32, #tpu.memory_space<vmem>>, vector<32x32xf32>
    %cst = arith.constant dense<0.000000e+00> : vector<32x128xf32>
    %7 = tpu.matmul %6, %5, %cst {dimension_numbers = #tpu.dot_dimension_numbers<[1], [0], [0], [1], [0, 0, 1, 1], [], []>} : vector<32x32xf32>, vector<32x128xf32>, vector<32x128xf32> -> vector<32x128xf32>
    %c0_3 = arith.constant 0 : index
    %c0_4 = arith.constant 0 : index
    %8 = vector.load %arg3[%c0_3, %c0_4] : memref<32x1xf32, #tpu.memory_space<vmem>>, vector<32x1xf32>
    %9 = vector.broadcast %8 : vector<32x1xf32> to vector<32x128xf32>
    %10 = arith.addf %7, %9 : vector<32x128xf32>
    %11 = math.tanh %10 : vector<32x128xf32>
    %c0_5 = arith.constant 0 : index
    %c0_6 = arith.constant 0 : index
    %12 = vector.load %arg4[%c0_5, %c0_6] : memref<8x32xf32, #tpu.memory_space<vmem>>, vector<8x32xf32>
    %cst_7 = arith.constant dense<0.000000e+00> : vector<8x128xf32>
    %13 = tpu.matmul %12, %11, %cst_7 {dimension_numbers = #tpu.dot_dimension_numbers<[1], [0], [0], [1], [0, 0, 1, 1], [], []>} : vector<8x32xf32>, vector<32x128xf32>, vector<8x128xf32> -> vector<8x128xf32>
    %c0_8 = arith.constant 0 : index
    %c0_9 = arith.constant 0 : index
    %14 = vector.load %arg5[%c0_8, %c0_9] : memref<8x1xf32, #tpu.memory_space<vmem>>, vector<8x1xf32>
    %15 = vector.broadcast %14 : vector<8x1xf32> to vector<8x128xf32>
    %16 = arith.addf %13, %15 : vector<8x128xf32>
    %17 = arith.negf %16 : vector<8x128xf32>
    %18 = math.exp %17 : vector<8x128xf32>
    %cst_10 = arith.constant 1.000000e+00 : f32
    %19 = vector.broadcast %cst_10 : f32 to vector<8x128xf32>
    %20 = arith.addf %19, %18 : vector<8x128xf32>
    %21 = arith.divf %19, %20 : vector<8x128xf32>
    %c0_11 = arith.constant 0 : index
    %c0_12 = arith.constant 0 : index
    %22 = vector.load %arg6[%c0_11, %c0_12] : memref<8x128xf32, #tpu.memory_space<vmem>>, vector<8x128xf32>
    tpu.vector_store %arg6[%c0_11, %c0_12], %21 {strides = array<i32>} : memref<8x128xf32, #tpu.memory_space<vmem>>, vector<8x128xf32>,
    return
  }
  func.func @transform_0(%arg0: i32) -> (i32, i32) {
    %c0_i32 = arith.constant 0 : i32
    %c0_i32_0 = arith.constant 0 : i32
    return %c0_i32, %arg0 : i32, i32
  }
  func.func @transform_1(%arg0: i32) -> (i32, i32) {
    %c0_i32 = arith.constant 0 : i32
    %c0_i32_0 = arith.constant 0 : i32
    %c0_i32_1 = arith.constant 0 : i32
    return %c0_i32, %c0_i32_0 : i32, i32
  }
  func.func @transform_2(%arg0: i32) -> (i32, i32) {
    %c0_i32 = arith.constant 0 : i32
    %c0_i32_0 = arith.constant 0 : i32
    %c0_i32_1 = arith.constant 0 : i32
    return %c0_i32, %c0_i32_0 : i32, i32
  }
  func.func @transform_3(%arg0: i32) -> (i32, i32) {
    %c0_i32 = arith.constant 0 : i32
    %c0_i32_0 = arith.constant 0 : i32
    %c0_i32_1 = arith.constant 0 : i32
    return %c0_i32, %c0_i32_0 : i32, i32
  }
  func.func @transform_4(%arg0: i32) -> (i32, i32) {
    %c0_i32 = arith.constant 0 : i32
    %c0_i32_0 = arith.constant 0 : i32
    %c0_i32_1 = arith.constant 0 : i32
    return %c0_i32, %c0_i32_0 : i32, i32
  }
  func.func @transform_5(%arg0: i32) -> (i32, i32) {
    %c0_i32 = arith.constant 0 : i32
    %c0_i32_0 = arith.constant 0 : i32
    return %c0_i32, %arg0 : i32, i32
  }
}

</mosaic_0001>

<llo_original>
// kernel: tpu_custom_call.1
$region0: #{tpu_custom_call.1}
  #allocation0 [shape = 'u32[]', space=smem, size = 0x4, offset = 0x4, fixed_abs, tag = 'smem constant byte address 0x4 - core index']
  #allocation1 [shape = 'u32[144,128]{1,0:T(1,128)}', space=vmem, size = 0x12000, scoped, tag = 'internal scratch']
  %s0 = inlined_call_operand.vmem [shape: s32[1,128], index: 0, kind: input, shape index: {}]
  %s1 = inlined_call_operand.vmem [shape: f32[32,32], index: 1, kind: input, shape index: {}]
  %s2 = inlined_call_operand.vmem [shape: f32[32,1], index: 2, kind: input, shape index: {}]
  %s3 = inlined_call_operand.vmem [shape: f32[8,32], index: 3, kind: input, shape index: {}]
  %s4 = inlined_call_operand.vmem [shape: f32[8,1], index: 4, kind: input, shape index: {}]
  %s5 = inlined_call_operand.hbm [shape: f32[8,128], index: 5, kind: output, shape index: {}]
  %s6 = sld [smem:[#allocation0]]
  $region30: #{tpu_custom_call.1} parent=0
    _
  %s8 = ssub.s32 1, %s6
  %s9 = scalar_select 0, %s8, %s6
  $region1: #{tpu_custom_call.1} parent=0
    #allocation2 [shape = 'u8[4096]{0}', space=vmem, size = 0x1000, scoped, tag = 'output window, operand 0, single buffered']
    #allocation3 [shape = 's32[1]{0}', space=sflag, size = 0x4, scoped, tag = 'scoped memory for tpu_custom_call.1']
    %10 = vsyncpa [#allocation3], 0
    // Predicated region
    $region2: #{tpu_custom_call.1} parent=1 // pred_check
      _
    $region3: #{tpu_custom_call.1} parent=1 // pred_check_branch
      %12 = sbr.rel (0) target = $region5
    $region4: #{tpu_custom_call.1} parent=1 // pred_region
      _
    $region5: #{tpu_custom_call.1} parent=1 // pred_fallthru
      _
    // Predicated region
    $region6: #{tpu_custom_call.1} parent=1 // pred_check
      _
    $region7: #{tpu_custom_call.1} parent=1 // pred_check_branch
      %14 = sbr.rel (0) target = $region9
    $region8: #{tpu_custom_call.1} parent=1 // pred_region
      _
    $region9: #{tpu_custom_call.1} parent=1 // pred_fallthru
      _
    // Predicated region
    $region10: #{tpu_custom_call.1} parent=1 // pred_check
      _
    $region11: #{tpu_custom_call.1} parent=1 // pred_check_branch
      %16 = sbr.rel (0) target = $region13
    $region12: #{tpu_custom_call.1} parent=1 // pred_region
      _
    $region13: #{tpu_custom_call.1} parent=1 // pred_fallthru
      _
    // Predicated region
    $region14: #{tpu_custom_call.1} parent=1 // pred_check
      _
    $region15: #{tpu_custom_call.1} parent=1 // pred_check_branch
      %18 = sbr.rel (0) target = $region17
    $region16: #{tpu_custom_call.1} parent=1 // pred_region
      _
    $region17: #{tpu_custom_call.1} parent=1 // pred_fallthru
      _
    // Predicated region
    $region18: #{tpu_custom_call.1} parent=1 // pred_check
      _
    $region19: #{tpu_custom_call.1} parent=1 // pred_check_branch
      %20 = sbr.rel (0) target = $region21
    $region20: #{tpu_custom_call.1} parent=1 // pred_region
      _
    $region21: #{tpu_custom_call.1} parent=1 // pred_fallthru
      _
    %v21 = vld [vmem:[%s0] sm:$0x1]
    %v22 = vlaneseq
    %v23 = vshrl.u32 %v22, 7
    %v24 = vadd.s32 %v23, 8
    %v25 = vadd.s32 %v23, 16
    %v26 = vadd.s32 %v23, 24
    %v27 = vlaneseq
    %v28 = vshrl.u32 %v27, 7
    %v29 = vsub.s32 0, %v28
    %v30 = vrot.slane %v21, %v29
    %vm31 = vcmp.eq.s32.totalorder %v23, %v30
    %vm32 = vcmp.eq.s32.totalorder %v24, %v30
    %vm33 = vcmp.eq.s32.totalorder %v25, %v30
    %vm34 = vcmp.eq.s32.totalorder %v26, %v30
    %v35 = vsel %vm31, 1, 0
    %v36 = vsel %vm32, 1, 0
    %v37 = vsel %vm33, 1, 0
    %v38 = vsel %vm34, 1, 0
    %v39 = vcvt.s32.f32 %v35
    %v40 = vcvt.s32.f32 %v36
    %v41 = vcvt.s32.f32 %v37
    %v42 = vcvt.s32.f32 %v38
    %v43 = vld [vmem:[%s1] sm:$0xff]
    %v44 = vld [vmem:[%s1 + $0x8] sm:$0xff]
    %v45 = vld [vmem:[%s1 + $0x10] sm:$0xff]
    %v46 = vld [vmem:[%s1 + $0x18] sm:$0xff]
    %v47 = vld [vmem:[%s2] sm:$0xff]
    %v48 = vld [vmem:[%s2 + $0x8] sm:$0xff]
    %v49 = vld [vmem:[%s2 + $0x10] sm:$0xff]
    %v50 = vld [vmem:[%s2 + $0x18] sm:$0xff]
    %52 = vset.pattern.permute.xlu0 0
    %53 = vperm.xlu0 %52, %v47
    %v54 = vpop.permute.xlu0 %53
    %57 = vset.pattern.permute.xlu0 0
    %58 = vperm.xlu0 %57, %v48
    %v59 = vpop.permute.xlu0 %58
    %62 = vset.pattern.permute.xlu0 0
    %63 = vperm.xlu0 %62, %v49
    %v64 = vpop.permute.xlu0 %63
    %67 = vset.pattern.permute.xlu0 0
    %68 = vperm.xlu0 %67, %v50
    %v69 = vpop.permute.xlu0 %68
    %vm71 = vcmask 261120
    %v73 = vsel %vm71, %v43, 0
    %v76 = vsel %vm71, %v44, 0
    %v79 = vsel %vm71, %v45, 0
    %v82 = vsel %vm71, %v46, 0
    %84 = vmatprep.subr.mxu0 0.0
    %85 = vmatpush1.msra.mxu0 %v39
    %86 = vmatprep.subr.mxu0 0.0
    %87 = vmatpush1.msra.mxu0 %v40
    %88 = vmatprep.subr.mxu0 0.0
    %89 = vmatpush1.msra.mxu0 %v41
    %90 = vmatprep.subr.mxu0 0.0
    %91 = vmatpush1.msra.mxu0 %v42
    %92 = vmatprep.subr.mxu0 0.0
    %93 = vmatpush1.msra.mxu0 0.0
    %94 = vmatprep.subr.mxu0 0.0
    %95 = vmatpush1.msra.mxu0 0.0
    %96 = vmatprep.subr.mxu0 0.0
    %97 = vmatpush1.msra.mxu0 0.0
    %98 = vmatprep.subr.mxu0 0.0
    %99 = vmatpush1.msra.mxu0 0.0
    %100 = vmatprep.subr.mxu0 0.0
    %101 = vmatpush1.msra.mxu0 0.0
    %102 = vmatprep.subr.mxu0 0.0
    %103 = vmatpush1.msra.mxu0 0.0
    %104 = vmatprep.subr.mxu0 0.0
    %105 = vmatpush1.msra.mxu0 0.0
    %106 = vmatprep.subr.mxu0 0.0
    %107 = vmatpush1.msra.mxu0 0.0
    %108 = vmatprep.subr.mxu0 0.0
    %109 = vmatpush1.msra.mxu0 0.0
    %110 = vmatprep.subr.mxu0 0.0
    %111 = vmatpush1.msra.mxu0 0.0
    %112 = vmatprep.subr.mxu0 0.0
    %113 = vmatpush1.msra.mxu0 0.0
    %114 = vmatprep.subr.mxu0 0.0
    %115 = vmatpush1.msra.mxu0 0.0
    %116 = vmatprep.subr.mxu0 0.0
    %117 = vmatpush1.msra.mxu0 0.0
    %118 = vmatprep.subr.mxu0 0.0
    %119 = vmatpush1.msra.mxu0 0.0
    %120 = vmatprep.subr.mxu0 0.0
    %121 = vmatpush1.msra.mxu0 0.0
    %122 = vmatprep.subr.mxu0 0.0
    %123 = vmatpush1.msra.mxu0 0.0
    %124 = vmatprep.subr.mxu0 0.0
    %125 = vmatpush1.msra.mxu0 0.0
    %126 = vmatprep.subr.mxu0 0.0
    %127 = vmatpush1.msra.mxu0 0.0
    %128 = vmatprep.subr.mxu0 0.0
    %129 = vmatpush1.msra.mxu0 0.0
    %130 = vmatprep.subr.mxu0 0.0
    %131 = vmatpush1.msra.mxu0 0.0
    %132 = vmatprep.subr.mxu0 0.0
    %133 = vmatpush1.msra.mxu0 0.0
    %134 = vmatprep.subr.mxu0 0.0
    %135 = vmatpush1.msra.mxu0 0.0
    %136 = vmatprep.subr.mxu0 0.0
    %137 = vmatpush1.msra.mxu0 0.0
    %138 = vmatprep.subr.mxu0 0.0
    %139 = vmatpush1.msra.mxu0 0.0
    %140 = vmatprep.subr.mxu0 0.0
    %141 = vmatpush1.msra.mxu0 0.0
    %142 = vmatprep.subr.mxu0 0.0
    %143 = vmatpush1.msra.mxu0 0.0
    %144 = vmatprep.subr.mxu0 0.0
    %145 = vmatpush1.msra.mxu0 0.0
    %146 = vmatprep.subr.mxu0 0.0
    %147 = vmatpush1.msra.mxu0 0.0
    %148 = vmatprep.mubr.f32.mxu0 0.0
    %149 = vmatmul.mubr.f32.gmra.mrb[0].mxu0 %v73
    %v150 = vpop.f32.mrb[0].mxu0
    %v151 = vadd.f32 %v54, %v150
    %v152 = vpop.f32.mrb[0].mxu0
    %153 = vmatprep.mubr.f32.mxu0 0.0
    %154 = vmatmul.mubr.f32.gmra.mrb[0].mxu0 %v76
    %v155 = vpop.f32.mrb[0].mxu0
    %v156 = vadd.f32 %v59, %v155
    %v157 = vpop.f32.mrb[0].mxu0
    %158 = vmatprep.mubr.f32.mxu0 0.0
    %159 = vmatmul.mubr.f32.gmra.mrb[0].mxu0 %v79
    %v160 = vpop.f32.mrb[0].mxu0
    %v161 = vadd.f32 %v64, %v160
    %v162 = vpop.f32.mrb[0].mxu0
    %163 = vmatprep.mubr.f32.mxu0 0.0
    %164 = vmatmul.mubr.f32.gmra.mrb[0].mxu0 %v82
    %v165 = vpop.f32.mrb[0].mxu0
    %v166 = vadd.f32 %v69, %v165
    %v167 = vpop.f32.mrb[0].mxu0
    %168 = vdwg.mxu0
    %v169 = vtanh.pop %v151
    %v170 = vtanh.pop %v156
    %v171 = vtanh.pop %v161
    %v172 = vtanh.pop %v166
    %v173 = vld [vmem:[%s3] sm:$0xff]
    %v174 = vld [vmem:[%s4] sm:$0xff]
    %176 = vset.pattern.permute.xlu0 0
    %177 = vperm.xlu0 %176, %v174
    %v178 = vpop.permute.xlu0 %177
    %v181 = vsel %vm71, %v173, 0
    %183 = vmatprep.subr.mxu0 0.0
    %184 = vmatpush1.msra.mxu0 %v169
    %185 = vmatprep.subr.mxu0 0.0
    %186 = vmatpush1.msra.mxu0 %v170
    %187 = vmatprep.subr.mxu0 0.0
    %188 = vmatpush1.msra.mxu0 %v171
    %189 = vmatprep.subr.mxu0 0.0
    %190 = vmatpush1.msra.mxu0 %v172
    %191 = vmatprep.subr.mxu0 0.0
    %192 = vmatpush1.msra.mxu0 0.0
    %193 = vmatprep.subr.mxu0 0.0
    %194 = vmatpush1.msra.mxu0 0.0
    %195 = vmatprep.subr.mxu0 0.0
    %196 = vmatpush1.msra.mxu0 0.0
    %197 = vmatprep.subr.mxu0 0.0
    %198 = vmatpush1.msra.mxu0 0.0
    %199 = vmatprep.subr.mxu0 0.0
    %200 = vmatpush1.msra.mxu0 0.0
    %201 = vmatprep.subr.mxu0 0.0
    %202 = vmatpush1.msra.mxu0 0.0
    %203 = vmatprep.subr.mxu0 0.0
    %204 = vmatpush1.msra.mxu0 0.0
    %205 = vmatprep.subr.mxu0 0.0
    %206 = vmatpush1.msra.mxu0 0.0
    %207 = vmatprep.subr.mxu0 0.0
    %208 = vmatpush1.msra.mxu0 0.0
    %209 = vmatprep.subr.mxu0 0.0
    %210 = vmatpush1.msra.mxu0 0.0
    %211 = vmatprep.subr.mxu0 0.0
    %212 = vmatpush1.msra.mxu0 0.0
    %213 = vmatprep.subr.mxu0 0.0
    %214 = vmatpush1.msra.mxu0 0.0
    %215 = vmatprep.subr.mxu0 0.0
    %216 = vmatpush1.msra.mxu0 0.0
    %217 = vmatprep.subr.mxu0 0.0
    %218 = vmatpush1.msra.mxu0 0.0
    %219 = vmatprep.subr.mxu0 0.0
    %220 = vmatpush1.msra.mxu0 0.0
    %221 = vmatprep.subr.mxu0 0.0
    %222 = vmatpush1.msra.mxu0 0.0
    %223 = vmatprep.subr.mxu0 0.0
    %224 = vmatpush1.msra.mxu0 0.0
    %225 = vmatprep.subr.mxu0 0.0
    %226 = vmatpush1.msra.mxu0 0.0
    %227 = vmatprep.subr.mxu0 0.0
    %228 = vmatpush1.msra.mxu0 0.0
    %229 = vmatprep.subr.mxu0 0.0
    %230 = vmatpush1.msra.mxu0 0.0
    %231 = vmatprep.subr.mxu0 0.0
    %232 = vmatpush1.msra.mxu0 0.0
    %233 = vmatprep.subr.mxu0 0.0
    %234 = vmatpush1.msra.mxu0 0.0
    %235 = vmatprep.subr.mxu0 0.0
    %236 = vmatpush1.msra.mxu0 0.0
    %237 = vmatprep.subr.mxu0 0.0
    %238 = vmatpush1.msra.mxu0 0.0
    %239 = vmatprep.subr.mxu0 0.0
    %240 = vmatpush1.msra.mxu0 0.0
    %241 = vmatprep.subr.mxu0 0.0
    %242 = vmatpush1.msra.mxu0 0.0
    %243 = vmatprep.subr.mxu0 0.0
    %244 = vmatpush1.msra.mxu0 0.0
    %245 = vmatprep.subr.mxu0 0.0
    %246 = vmatpush1.msra.mxu0 0.0
    %247 = vmatprep.mubr.f32.mxu0 0.0
    %248 = vmatmul.mubr.f32.gmra.mrb[0].mxu0 %v181
    %v249 = vpop.f32.mrb[0].mxu0
    %v250 = vadd.f32 %v178, %v249
    %v251 = vpop.f32.mrb[0].mxu0
    %252 = vdwg.mxu0
    %v253 = vxor.u32 %v250, 2147483648
    %v254 = vmul.f32 %v253, 1.442695
    %v255 = vpow.pop %v254
    %v256 = vadd.f32 %v255, 1.0
    %v257 = vrcp.pop %v256
    %v258 = vmul.f32 1.0, %v257
    %259 = vst [vmem:[#allocation2] sm:$0xff] %v258
    // Predicated region
    $region22: #{tpu_custom_call.1} parent=1 // pred_check
      _
    $region23: #{tpu_custom_call.1} parent=1 // pred_check_branch
      %261 = sbr.rel (0) target = $region25
    $region24: #{tpu_custom_call.1} parent=1 // pred_region
      %s263 = ssub.s32 128, 128
      %264 = vsyncadd [#allocation3], %s263
      %s266 = sshll.u32 [#allocation2], 4
      %s267 = int_to_ptr.vmem [resolvable:$true] %s266
      %269 = dma.vmem_to_hbm [thread:$0]  %s267, 128, %s5, [#allocation3]
    $region25: #{tpu_custom_call.1} parent=1 // pred_fallthru
      _
    // Predicated region
    $region26: #{tpu_custom_call.1} parent=1 // pred_check
      _
    $region27: #{tpu_custom_call.1} parent=1 // pred_check_branch
      %271 = sbr.rel (0) target = $region29
    $region28: #{tpu_custom_call.1} parent=1 // pred_region
      %272 = dma.done [#allocation3], 128
    $region29: #{tpu_custom_call.1} parent=1 // pred_fallthru
      _
    %273 = vsyncpa [#allocation3], 1

</llo_original>
